<compile_context>
chip_gen: v7x
topology: tpu7x:2x2x1
jax: 0.10.0
libtpu: 0.0.40
codegen_flags: <defaults>
</compile_context>

<pallas_src>
import functools

import jax
import jax.numpy as jnp
from jax.experimental import pallas as pl
from jax.experimental.pallas import tpu as pltpu


def _round_up(x, m):
    return ((x + m - 1) // m) * m


def _pick_divisor_tile(dim, candidates):
    """Largest candidate that divides `dim` (falls back to dim itself)."""
    for c in candidates:
        if dim % c == 0:
            return c
    return dim


# --------------------------- kernels ---------------------------

def _linear_kernel_acc(x_ref, w_ref, *rest, with_relu, use_bias):
    """K-tiled path: 3-D grid (M, N, K), persistent f32 accumulator."""
    if use_bias:
        b_ref, o_ref, acc_ref = rest
    else:
        o_ref, acc_ref = rest
        b_ref = None

    k = pl.program_id(2)

    @pl.when(k == 0)
    def _():
        if use_bias:
            # Fold bias into the accumulator init -> no epilogue add.
            acc_ref[...] = jnp.broadcast_to(
                b_ref[...].astype(jnp.float32), acc_ref.shape)
        else:
            acc_ref[...] = jnp.zeros_like(acc_ref)

    acc_ref[...] += jnp.dot(x_ref[...], w_ref[...],
                            preferred_element_type=jnp.float32)

    @pl.when(k == pl.num_programs(2) - 1)
    def _():
        acc = acc_ref[...]
        if with_relu:
            acc = jnp.maximum(acc, 0.0)
        o_ref[...] = acc.astype(o_ref.dtype)


def _linear_kernel_single(x_ref, w_ref, *rest, with_relu, use_bias):
    """Fast path: whole reduction in one K tile -> no scratch accumulator."""
    if use_bias:
        b_ref, o_ref = rest
    else:
        (o_ref,) = rest
        b_ref = None
    acc = jnp.dot(x_ref[...], w_ref[...], preferred_element_type=jnp.float32)
    if use_bias:
        acc = acc + b_ref[...].astype(jnp.float32)
    if with_relu:
        acc = jnp.maximum(acc, 0.0)
    o_ref[...] = acc.astype(o_ref.dtype)


# --------------------------- wrapper ---------------------------

def _linear_forward(x2d, w_pad, b_pad, *, M, K, N, Kp, Np,
                    with_relu, compute_dtype, out_dtype):
    """x2d: (M, K) unpadded.  w_pad: (Kp, Np).  b_pad: (1, Np) f32 or None."""
    use_bias = b_pad is not None

    # ---- tile selection (big tiles; footprint checked below) ----
    sub = 8 if jnp.dtype(compute_dtype).itemsize == 4 else 16
    Mp = _round_up(M, sub)
    if Mp <= 512:
        tm = Mp
    else:
        tm = 512
        Mp = _round_up(M, tm)

    # Np is a multiple of 256 whenever N > 128 (construction-time padding),
    # so tn is 512 or 256 except for genuinely tiny layers.
    tn = _pick_divisor_tile(Np, (512, 256, 128))

    # Kp is a multiple of 512 whenever K > 1024, so tk is 1024 or 512.
    if Kp <= 1024:
        tk = Kp
    else:
        tk = _pick_divisor_tile(Kp, (1024, 512, 256, 128))
    k_steps = Kp // tk

    # ---- pad activations (zeros in padded K contribute nothing) ----
    x2d = x2d.astype(compute_dtype)
    if Mp != M or Kp != K:
        x2d = jnp.pad(x2d, ((0, Mp - M), (0, Kp - K)))

    args = [x2d, w_pad]
    if k_steps == 1:
        # Fast path: no accumulator, 2-D all-parallel grid.
        grid = (Mp // tm, Np // tn)
        in_specs = [
            pl.BlockSpec((tm, tk), lambda i, j: (i, 0)),
            pl.BlockSpec((tk, tn), lambda i, j: (0, j)),
        ]
        if use_bias:
            in_specs.append(pl.BlockSpec((1, tn), lambda i, j: (0, j)))
            args.append(b_pad)
        out_spec = pl.BlockSpec((tm, tn), lambda i, j: (i, j))
        scratch = []
        kernel = functools.partial(_linear_kernel_single,
                                   with_relu=with_relu, use_bias=use_bias)
        semantics = ("parallel", "parallel")
    else:
        grid = (Mp // tm, Np // tn, k_steps)
        in_specs = [
            pl.BlockSpec((tm, tk), lambda i, j, k: (i, k)),
            # If profiling shows exposed weight DMA (v5e f32 weights), try
            # pipeline_mode=pl.Buffered(3) here.
            pl.BlockSpec((tk, tn), lambda i, j, k: (k, j)),
        ]
        if use_bias:
            in_specs.append(pl.BlockSpec((1, tn), lambda i, j, k: (0, j)))
            args.append(b_pad)
        out_spec = pl.BlockSpec((tm, tn), lambda i, j, k: (i, j))
        scratch = [pltpu.VMEM((tm, tn), jnp.float32)]
        kernel = functools.partial(_linear_kernel_acc,
                                   with_relu=with_relu, use_bias=use_bias)
        semantics = ("parallel", "parallel", "arbitrary")

    # ---- VMEM budget derived from actual tile bytes (+50% headroom),
    #      clamped to remain valid on v7x (64 MiB physical). ----
    iti = jnp.dtype(compute_dtype).itemsize
    ito = jnp.dtype(out_dtype).itemsize
    tile_bytes = (2 * (tm * tk + tk * tn) * iti          # double-buffered x, w
                  + 2 * tm * tn * ito                    # double-buffered out
                  + tm * tn * 4                          # f32 accumulator
                  + 2 * tn * 4)                          # bias
    vmem_limit = int(tile_bytes * 1.5)
    vmem_limit = max(vmem_limit, 32 * 1024 * 1024)
    vmem_limit = min(vmem_limit, 56 * 1024 * 1024)

    out_pad = pl.pallas_call(
        kernel,
        out_shape=jax.ShapeDtypeStruct((Mp, Np), out_dtype),
        grid_spec=pltpu.PrefetchScalarGridSpec(
            num_scalar_prefetch=0,
            grid=grid,
            in_specs=in_specs,
            out_specs=out_spec,
            scratch_shapes=scratch,
        ),
        compiler_params=pltpu.CompilerParams(
            dimension_semantics=semantics,
            vmem_limit_bytes=vmem_limit,
        ),
    )(*args)

    if Mp != M or Np != N:
        out_pad = out_pad[:M, :N]
    return out_pad


class PallasLinear:
    """JAX/Pallas equivalent of the PyTorch `Linear` module (digital path).

    compute_dtype=jnp.bfloat16 is recommended on v6e/v7x (full-rate MXU,
    half the weight/activation HBM traffic); accumulation is always f32.
    Default stays float32 to match PyTorch nn.Linear numerics.
    """

    def __init__(self, in_features, out_features, bias=True, with_relu=True,
                 name="fc", key=None, compute_dtype=jnp.float32):
        self.in_features = in_features
        self.out_features = out_features
        self.bias = bias
        self.with_relu = with_relu
        self.name = name
        self.compute_dtype = compute_dtype

        if key is None:
            key = jax.random.PRNGKey(0)
        kw, kb = jax.random.split(key)
        # nn.Linear default init: U(-1/sqrt(in), 1/sqrt(in))
        bound = 1.0 / (in_features ** 0.5)
        # master copies (f32, unpadded); weight stored as (in, out) == W.T
        self.weight = jax.random.uniform(
            kw, (in_features, out_features), jnp.float32, -bound, bound)
        self.bias_param = (
            jax.random.uniform(kb, (1, out_features), jnp.float32, -bound, bound)
            if bias else None)

        # Construction-time padding so the kernel always gets MXU-friendly
        # tiles: K -> 512 multiple once it exceeds one reduction tile,
        # N -> 256 multiple once it exceeds one lane group.
        self._Kp = (_round_up(in_features, 128) if in_features <= 1024
                    else _round_up(in_features, 512))
        self._Np = (_round_up(out_features, 128) if out_features <= 128
                    else _round_up(out_features, 256))
        w = self.weight.astype(compute_dtype)
        self._w_pad = jnp.pad(
            w, ((0, self._Kp - in_features), (0, self._Np - out_features)))
        self._b_pad = (
            jnp.pad(self.bias_param, ((0, 0), (0, self._Np - out_features)))
            if bias else None)

    def __call__(self, inputs):
        input_shape = inputs.shape
        assert input_shape[-1] == self.in_features
        lead = input_shape[:-1]
        M = 1
        for d in lead:
            M *= d
        K, N = self.in_features, self.out_features

        out2d = _linear_forward(
            inputs.reshape(M, K), self._w_pad, self._b_pad,
            M=M, K=K, N=N, Kp=self._Kp, Np=self._Np,
            with_relu=self.with_relu,
            compute_dtype=self.compute_dtype,
            out_dtype=inputs.dtype)

        outputs = out2d.reshape(*lead, N)

        mac_ops = K * N
        if self.bias:
            mac_ops += N
        return outputs, mac_ops


if __name__ == "__main__":
    key = jax.random.PRNGKey(0)
    k_in, k_p1, k_p2, k_p3, k_p4, k_in4 = jax.random.split(key, 6)

    # --- Test 1: small demo shape, f32, bias + ReLU (fast path, K fits) ---
    batch, seq, in_features, out_features = 2, 8, 32, 64
    x = jax.random.normal(k_in, (batch, seq, in_features), jnp.float32)
    layer = PallasLinear(in_features, out_features, bias=True,
                         with_relu=True, key=k_p1)
    out, mac_ops = layer(x)
    out = jax.block_until_ready(out)
    ref = jnp.maximum(x @ layer.weight + layer.bias_param[0], 0.0)
    assert out.shape == (batch, seq, out_features)
    assert mac_ops == in_features * out_features + out_features
    assert jnp.allclose(out, ref, atol=1e-5, rtol=1e-5)

    # --- Test 2: non-aligned shapes, no bias, no ReLU (K/N padding, tn=256) ---
    M2, K2, N2 = 37, 300, 200
    x2 = jax.random.normal(k_in, (M2, K2), jnp.float32)
    layer2 = PallasLinear(K2, N2, bias=False, with_relu=False, key=k_p2)
    out2, mac2 = layer2(x2)
    out2 = jax.block_until_ready(out2)
    ref2 = x2 @ layer2.weight
    assert out2.shape == (M2, N2)
    assert mac2 == K2 * N2
    assert jnp.allclose(out2, ref2, atol=1e-4, rtol=1e-4)

    # --- Test 3: bf16 compute path (f32 accumulation in kernel) ---
    layer3 = PallasLinear(in_features, out_features, bias=True, with_relu=True,
                          key=k_p3, compute_dtype=jnp.bfloat16)
    out3, _ = layer3(x)
    out3 = jax.block_until_ready(out3)
    ref3 = jnp.maximum(
        x.astype(jnp.bfloat16).astype(jnp.float32)
        @ layer3.weight.astype(jnp.bfloat16).astype(jnp.float32)
        + layer3.bias_param[0], 0.0)
    assert jnp.allclose(out3, ref3, atol=2e-2, rtol=2e-2)

    # --- Test 4: K > 1024 exercises the K-tiled accumulator path
    #             (bias folded into k==0 init, ReLU at k==last) ---
    M4, K4, N4 = 24, 1100, 96
    x4 = jax.random.normal(k_in4, (M4, K4), jnp.float32)
    layer4 = PallasLinear(K4, N4, bias=True, with_relu=True, key=k_p4)
    out4, mac4 = layer4(x4)
    out4 = jax.block_until_ready(out4)
    ref4 = jnp.maximum(x4 @ layer4.weight + layer4.bias_param[0], 0.0)
    assert out4.shape == (M4, N4)
    assert mac4 == K4 * N4 + N4
    assert jnp.allclose(out4, ref4, atol=1e-3, rtol=1e-3)

    print("KERNEL_OK")
</pallas_src>

<mosaic_0001>
module attributes {stable_mosaic.version = 11 : i64} {
  func.func @_linear_kernel_single(%arg0: i32, %arg1: i32, %arg2: memref<16x128xf32, #tpu.memory_space<vmem>>, %arg3: memref<128x128xf32, #tpu.memory_space<vmem>>, %arg4: memref<1x128xf32, #tpu.memory_space<vmem>>, %arg5: memref<16x128xf32, #tpu.memory_space<vmem>>) attributes {dimension_semantics = [#tpu.dimension_semantics<parallel>, #tpu.dimension_semantics<parallel>], iteration_bounds = array<i64: 1, 1>, scalar_prefetch = 0 : i64, scratch_operands = 0 : i64, tpu.core_type = #tpu.core_type<tc>, window_params = [{transform_indices = @transform_0, window_bounds = array<i64: 16, 128>}, {transform_indices = @transform_1, window_bounds = array<i64: 128, 128>}, {transform_indices = @transform_2, window_bounds = array<i64: 1, 128>}, {transform_indices = @transform_3, window_bounds = array<i64: 16, 128>}]} {
    %c0 = arith.constant 0 : index
    %c0_0 = arith.constant 0 : index
    %0 = vector.load %arg2[%c0, %c0_0] : memref<16x128xf32, #tpu.memory_space<vmem>>, vector<16x128xf32>
    %c0_1 = arith.constant 0 : index
    %c0_2 = arith.constant 0 : index
    %1 = vector.load %arg3[%c0_1, %c0_2] : memref<128x128xf32, #tpu.memory_space<vmem>>, vector<128x128xf32>
    %cst = arith.constant dense<0.000000e+00> : vector<16x128xf32>
    %2 = tpu.matmul %0, %1, %cst {dimension_numbers = #tpu.dot_dimension_numbers<[1], [0], [0], [1], [0, 0, 1, 1], [], []>} : vector<16x128xf32>, vector<128x128xf32>, vector<16x128xf32> -> vector<16x128xf32>
    %c0_3 = arith.constant 0 : index
    %c0_4 = arith.constant 0 : index
    %3 = vector.load %arg4[%c0_3, %c0_4] : memref<1x128xf32, #tpu.memory_space<vmem>>, vector<1x128xf32>
    %4 = vector.broadcast %3 : vector<1x128xf32> to vector<16x128xf32>
    %5 = arith.addf %2, %4 : vector<16x128xf32>
    %cst_5 = arith.constant 0.000000e+00 : f32
    %6 = vector.broadcast %cst_5 : f32 to vector<16x128xf32>
    %7 = arith.maximumf %5, %6 : vector<16x128xf32>
    %c0_6 = arith.constant 0 : index
    %c0_7 = arith.constant 0 : index
    %8 = vector.load %arg5[%c0_6, %c0_7] : memref<16x128xf32, #tpu.memory_space<vmem>>, vector<16x128xf32>
    tpu.vector_store %arg5[%c0_6, %c0_7], %7 {strides = array<i32>} : memref<16x128xf32, #tpu.memory_space<vmem>>, vector<16x128xf32>,
    return
  }
  func.func @transform_0(%arg0: i32, %arg1: i32) -> (i32, i32) {
    %c0_i32 = arith.constant 0 : i32
    %c0_i32_0 = arith.constant 0 : i32
    return %arg0, %c0_i32 : i32, i32
  }
  func.func @transform_1(%arg0: i32, %arg1: i32) -> (i32, i32) {
    %c0_i32 = arith.constant 0 : i32
    %c0_i32_0 = arith.constant 0 : i32
    return %c0_i32, %arg1 : i32, i32
  }
  func.func @transform_2(%arg0: i32, %arg1: i32) -> (i32, i32) {
    %c0_i32 = arith.constant 0 : i32
    %c0_i32_0 = arith.constant 0 : i32
    return %c0_i32, %arg1 : i32, i32
  }
  func.func @transform_3(%arg0: i32, %arg1: i32) -> (i32, i32) {
    %c0_i32 = arith.constant 0 : i32
    return %arg0, %arg1 : i32, i32
  }
}

</mosaic_0001>

<llo_original>
// kernel: tpu_custom_call.1
$region0: #{tpu_custom_call.1}
  #allocation0 [shape = 'u32[]', space=smem, size = 0x4, offset = 0x4, fixed_abs, tag = 'smem constant byte address 0x4 - core index']
  #allocation1 [shape = 'u32[144,128]{1,0:T(1,128)}', space=vmem, size = 0x12000, scoped, tag = 'internal scratch']
  %s0 = inlined_call_operand.hbm [shape: f32[16,128], index: 0, kind: input, shape index: {}]
  %s1 = inlined_call_operand.hbm [shape: f32[128,128], index: 1, kind: input, shape index: {}]
  %s2 = inlined_call_operand.vmem [shape: f32[1,128], index: 2, kind: input, shape index: {}]
  %s3 = inlined_call_operand.hbm [shape: f32[16,128], index: 3, kind: output, shape index: {}]
  %s4 = sld [smem:[#allocation0]]
  $region30: #{tpu_custom_call.1} parent=0
    _
  %s6 = ssub.s32 1, %s4
  %s7 = scalar_select 0, %s6, %s4
  $region1: #{tpu_custom_call.1} parent=0
    #allocation2 [shape = 'u8[8192]{0}', space=vmem, size = 0x2000, scoped, tag = 'input window, operand 0, single buffered']
    #allocation3 [shape = 's32[1]{0}', space=sflag, size = 0x4, scoped, tag = 'scoped memory for tpu_custom_call.1']
    #allocation4 [shape = 's32[1]{0}', space=sflag, size = 0x4, scoped, tag = 'scoped memory for tpu_custom_call.1']
    #allocation5 [shape = 'u8[65536]{0}', space=vmem, size = 0x10000, scoped, tag = 'input window, operand 1, single buffered']
    #allocation6 [shape = 's32[1]{0}', space=sflag, size = 0x4, scoped, tag = 'scoped memory for tpu_custom_call.1']
    #allocation7 [shape = 'u8[8192]{0}', space=vmem, size = 0x2000, scoped, tag = 'output window, operand 0, single buffered']
    %8 = vsyncpa [#allocation3], 0
    %9 = vsyncpa [#allocation6], 0
    %10 = vsyncpa [#allocation4], 0
    // Predicated region
    $region2: #{tpu_custom_call.1} parent=1 // pred_check
      _
    $region3: #{tpu_custom_call.1} parent=1 // pred_check_branch
      %12 = sbr.rel (0) target = $region5
    $region4: #{tpu_custom_call.1} parent=1 // pred_region
      %s14 = ssub.s32 256, 256
      %15 = vsyncadd [#allocation3], %s14
      %s16 = sshll.u32 [#allocation2], 4
      %s17 = int_to_ptr.vmem [resolvable:$true] %s16
      %22 = dma.hbm_to_vmem [thread:$0]  %s0, 256, %s17, [#allocation3], 128, 128, 8
    $region5: #{tpu_custom_call.1} parent=1 // pred_fallthru
      _
    // Predicated region
    $region6: #{tpu_custom_call.1} parent=1 // pred_check
      _
    $region7: #{tpu_custom_call.1} parent=1 // pred_check_branch
      %24 = sbr.rel (0) target = $region9
    $region8: #{tpu_custom_call.1} parent=1 // pred_region
      %s26 = ssub.s32 2048, 2048
      %27 = vsyncadd [#allocation6], %s26
      %s28 = sshll.u32 [#allocation5], 4
      %s29 = int_to_ptr.vmem [resolvable:$true] %s28
      %34 = dma.hbm_to_vmem [thread:$0]  %s1, 2048, %s29, [#allocation6], 128, 128, 8
    $region9: #{tpu_custom_call.1} parent=1 // pred_fallthru
      _
    // Predicated region
    $region10: #{tpu_custom_call.1} parent=1 // pred_check
      _
    $region11: #{tpu_custom_call.1} parent=1 // pred_check_branch
      %36 = sbr.rel (0) target = $region13
    $region12: #{tpu_custom_call.1} parent=1 // pred_region
      _
    $region13: #{tpu_custom_call.1} parent=1 // pred_fallthru
      _
    // Predicated region
    $region14: #{tpu_custom_call.1} parent=1 // pred_check
      _
    $region15: #{tpu_custom_call.1} parent=1 // pred_check_branch
      %38 = sbr.rel (0) target = $region17
    $region16: #{tpu_custom_call.1} parent=1 // pred_region
      %39 = dma.done [#allocation3], 256
    $region17: #{tpu_custom_call.1} parent=1 // pred_fallthru
      _
    // Predicated region
    $region18: #{tpu_custom_call.1} parent=1 // pred_check
      _
    $region19: #{tpu_custom_call.1} parent=1 // pred_check_branch
      %41 = sbr.rel (0) target = $region21
    $region20: #{tpu_custom_call.1} parent=1 // pred_region
      %42 = dma.done [#allocation6], 2048
    $region21: #{tpu_custom_call.1} parent=1 // pred_fallthru
      _
    %v43 = vld [vmem:[#allocation2] sm:$0xff]
    %v44 = vld [vmem:[#allocation2 + $0x8] sm:$0xff]
    %v45 = vld [vmem:[#allocation5] sm:$0xff]
    %v46 = vld [vmem:[#allocation5 + $0x8] sm:$0xff]
    %v47 = vld [vmem:[#allocation5 + $0x10] sm:$0xff]
    %v48 = vld [vmem:[#allocation5 + $0x18] sm:$0xff]
    %v49 = vld [vmem:[#allocation5 + $0x20] sm:$0xff]
    %v50 = vld [vmem:[#allocation5 + $0x28] sm:$0xff]
    %v51 = vld [vmem:[#allocation5 + $0x30] sm:$0xff]
    %v52 = vld [vmem:[#allocation5 + $0x38] sm:$0xff]
    %v53 = vld [vmem:[#allocation5 + $0x40] sm:$0xff]
    %v54 = vld [vmem:[#allocation5 + $0x48] sm:$0xff]
    %v55 = vld [vmem:[#allocation5 + $0x50] sm:$0xff]
    %v56 = vld [vmem:[#allocation5 + $0x58] sm:$0xff]
    %v57 = vld [vmem:[#allocation5 + $0x60] sm:$0xff]
    %v58 = vld [vmem:[#allocation5 + $0x68] sm:$0xff]
    %v59 = vld [vmem:[#allocation5 + $0x70] sm:$0xff]
    %v60 = vld [vmem:[#allocation5 + $0x78] sm:$0xff]
    %v61 = vld [vmem:[%s2] sm:$0x1]
    %v63 = vlaneseq
    %v64 = vshrl.u32 %v63, 7
    %v65 = vsub.s32 0, %v64
    %v66 = vrot.slane %v61, %v65
    %68 = vmatprep.subr.mxu0 0.0
    %69 = vmatpush1.msra.mxu0 %v45
    %70 = vmatprep.subr.mxu0 0.0
    %71 = vmatpush1.msra.mxu0 %v46
    %72 = vmatprep.subr.mxu0 0.0
    %73 = vmatpush1.msra.mxu0 %v47
    %74 = vmatprep.subr.mxu0 0.0
    %75 = vmatpush1.msra.mxu0 %v48
    %76 = vmatprep.subr.mxu0 0.0
    %77 = vmatpush1.msra.mxu0 %v49
    %78 = vmatprep.subr.mxu0 0.0
    %79 = vmatpush1.msra.mxu0 %v50
    %80 = vmatprep.subr.mxu0 0.0
    %81 = vmatpush1.msra.mxu0 %v51
    %82 = vmatprep.subr.mxu0 0.0
    %83 = vmatpush1.msra.mxu0 %v52
    %84 = vmatprep.subr.mxu0 0.0
    %85 = vmatpush1.msra.mxu0 %v53
    %86 = vmatprep.subr.mxu0 0.0
    %87 = vmatpush1.msra.mxu0 %v54
    %88 = vmatprep.subr.mxu0 0.0
    %89 = vmatpush1.msra.mxu0 %v55
    %90 = vmatprep.subr.mxu0 0.0
    %91 = vmatpush1.msra.mxu0 %v56
    %92 = vmatprep.subr.mxu0 0.0
    %93 = vmatpush1.msra.mxu0 %v57
    %94 = vmatprep.subr.mxu0 0.0
    %95 = vmatpush1.msra.mxu0 %v58
    %96 = vmatprep.subr.mxu0 0.0
    %97 = vmatpush1.msra.mxu0 %v59
    %98 = vmatprep.subr.mxu0 0.0
    %99 = vmatpush1.msra.mxu0 %v60
    %100 = vmatprep.subr.mxu0 0.0
    %101 = vmatpush1.msra.mxu0 0.0
    %102 = vmatprep.subr.mxu0 0.0
    %103 = vmatpush1.msra.mxu0 0.0
    %104 = vmatprep.subr.mxu0 0.0
    %105 = vmatpush1.msra.mxu0 0.0
    %106 = vmatprep.subr.mxu0 0.0
    %107 = vmatpush1.msra.mxu0 0.0
    %108 = vmatprep.subr.mxu0 0.0
    %109 = vmatpush1.msra.mxu0 0.0
    %110 = vmatprep.subr.mxu0 0.0
    %111 = vmatpush1.msra.mxu0 0.0
    %112 = vmatprep.subr.mxu0 0.0
    %113 = vmatpush1.msra.mxu0 0.0
    %114 = vmatprep.subr.mxu0 0.0
    %115 = vmatpush1.msra.mxu0 0.0
    %116 = vmatprep.subr.mxu0 0.0
    %117 = vmatpush1.msra.mxu0 0.0
    %118 = vmatprep.subr.mxu0 0.0
    %119 = vmatpush1.msra.mxu0 0.0
    %120 = vmatprep.subr.mxu0 0.0
    %121 = vmatpush1.msra.mxu0 0.0
    %122 = vmatprep.subr.mxu0 0.0
    %123 = vmatpush1.msra.mxu0 0.0
    %124 = vmatprep.subr.mxu0 0.0
    %125 = vmatpush1.msra.mxu0 0.0
    %126 = vmatprep.subr.mxu0 0.0
    %127 = vmatpush1.msra.mxu0 0.0
    %128 = vmatprep.subr.mxu0 0.0
    %129 = vmatpush1.msra.mxu0 0.0
    %130 = vmatprep.subr.mxu0 0.0
    %131 = vmatpush1.msra.mxu0 0.0
    %132 = vmatprep.mubr.f32.mxu0 0.0
    %133 = vmatmul.mubr.f32.gmra.mrb[0].mxu0 %v43
    %v134 = vpop.f32.mrb[0].mxu0
    %v135 = vadd.f32 %v66, %v134
    %v136 = vpop.f32.mrb[0].mxu0
    %137 = vmatprep.mubr.f32.mxu0 0.0
    %138 = vmatmul.mubr.f32.gmra.mrb[0].mxu0 %v44
    %v139 = vpop.f32.mrb[0].mxu0
    %v140 = vadd.f32 %v66, %v139
    %v141 = vpop.f32.mrb[0].mxu0
    %142 = vdwg.mxu0
    %v143 = vmax.f32 %v135, 0.0
    %v144 = vmax.f32 %v140, 0.0
    %145 = vst [vmem:[#allocation7] sm:$0xff] %v143
    %146 = vst [vmem:[#allocation7 + $0x8] sm:$0xff] %v144
    // Predicated region
    $region22: #{tpu_custom_call.1} parent=1 // pred_check
      _
    $region23: #{tpu_custom_call.1} parent=1 // pred_check_branch
      %148 = sbr.rel (0) target = $region25
    $region24: #{tpu_custom_call.1} parent=1 // pred_region
      %s150 = ssub.s32 256, 256
      %151 = vsyncadd [#allocation4], %s150
      %s152 = sshll.u32 [#allocation7], 4
      %s153 = int_to_ptr.vmem [resolvable:$true] %s152
      %158 = dma.vmem_to_hbm [thread:$0]  %s153, 256, %s3, [#allocation4], 128, 128, 8
    $region25: #{tpu_custom_call.1} parent=1 // pred_fallthru
      _
    // Predicated region
    $region26: #{tpu_custom_call.1} parent=1 // pred_check
      _
    $region27: #{tpu_custom_call.1} parent=1 // pred_check_branch
      %160 = sbr.rel (0) target = $region29
    $region28: #{tpu_custom_call.1} parent=1 // pred_region
      %161 = dma.done [#allocation4], 256
    $region29: #{tpu_custom_call.1} parent=1 // pred_fallthru
      _
    %162 = vsyncpa [#allocation3], 1
    %163 = vsyncpa [#allocation6], 1
    %164 = vsyncpa [#allocation4], 1

</llo_original>
